<compile_context>
chip_gen: v5e
topology: v5e:2x2
jax: 0.10.0
libtpu: 0.0.40
codegen_flags: <defaults>
</compile_context>

<pallas_src>
import jax
import jax.numpy as jnp
from jax.experimental import pallas as pl
from jax.experimental.pallas import tpu as pltpu

LANE = 128      # lane width: last dim of streamed blocks (batch axis)
SUBLANE = 16    # bf16 sublane packing: pad class / hidden dims to this


def _round_up(x, m):
    return (x + m - 1) // m * m


def _leaky_relu(v, slope=0.2):
    return jnp.where(v >= 0, v, slope * v)


def dnn_kernel(xT_ref,
               w1_ref, b1_ref,
               w2_ref, b2_ref,
               w3_ref, b3_ref,
               w4_ref, b4_ref,
               oT_ref):
    """Fused batch-on-lanes MLP: h^T = W^T @ x^T.

    xT_ref : (c_pad, TB) bf16   -- streamed per grid step (already bf16)
    wK_ref : transposed, zero-padded bf16 weights (out_pad, in_pad), resident
    bK_ref : (out_pad, 1) f32 column biases, resident
    oT_ref : (c_pad, TB) bf16   -- streamed per grid step
    """
    xT = xT_ref[...]  # bf16 already; no in-kernel cast of the streamed input
    h = jnp.dot(w1_ref[...], xT, preferred_element_type=jnp.float32)
    h = _leaky_relu(h + b1_ref[...])
    h = jnp.dot(w2_ref[...], h.astype(jnp.bfloat16),
                preferred_element_type=jnp.float32)
    h = _leaky_relu(h + b2_ref[...])
    h = jnp.dot(w3_ref[...], h.astype(jnp.bfloat16),
                preferred_element_type=jnp.float32)
    h = _leaky_relu(h + b3_ref[...])
    h = jnp.dot(w4_ref[...], h.astype(jnp.bfloat16),
                preferred_element_type=jnp.float32)
    oT_ref[...] = (h + b4_ref[...]).astype(oT_ref.dtype)


def init_params(key, infeature, numclass):
    """PyTorch-Linear-style init (uniform +/- 1/sqrt(fan_in)).
    Weights in math orientation (in, out); biases (1, out). All f32."""
    def linear(key, fan_in, fan_out):
        kw, kb = jax.random.split(key)
        bound = 1.0 / jnp.sqrt(fan_in)
        w = jax.random.uniform(kw, (fan_in, fan_out), jnp.float32, -bound, bound)
        b = jax.random.uniform(kb, (1, fan_out), jnp.float32, -bound, bound)
        return w, b

    k1, k2, k3, k4 = jax.random.split(key, 4)
    w1, b1 = linear(k1, numclass, infeature)
    w2, b2 = linear(k2, infeature, infeature)
    w3, b3 = linear(k3, infeature, infeature)
    w4, b4 = linear(k4, infeature, numclass)
    return {"w1": w1, "b1": b1, "w2": w2, "b2": b2,
            "w3": w3, "b3": b3, "w4": w4, "b4": b4}


def prepare_params(params):
    """Transpose, zero-pad (to SUBLANE multiples) and cast weights to bf16.

    Weights are stored as W^T (out_pad, in_pad) so the kernel computes
    h^T = W^T @ x^T with batch on the lane axis. Padded rows/cols are exactly
    zero so they contribute nothing; biases stay f32 columns (out_pad, 1) and
    are added to the f32 accumulator."""
    in_dim = params["w1"].shape[0]     # numclass (input features)
    hid = params["w1"].shape[1]        # infeature (hidden width)
    out_dim = params["w4"].shape[1]    # numclass (output features)
    c_pad = _round_up(max(in_dim, out_dim), SUBLANE)
    f_pad = _round_up(hid, SUBLANE)

    def pad_wT(w, rows, cols):
        buf = jnp.zeros((rows, cols), jnp.bfloat16)
        return buf.at[:w.shape[1], :w.shape[0]].set(w.T.astype(jnp.bfloat16))

    def pad_bcol(b, rows):
        buf = jnp.zeros((rows, 1), jnp.float32)
        return buf.at[:b.shape[1], :].set(b.T)

    return {
        "w1": pad_wT(params["w1"], f_pad, c_pad), "b1": pad_bcol(params["b1"], f_pad),
        "w2": pad_wT(params["w2"], f_pad, f_pad), "b2": pad_bcol(params["b2"], f_pad),
        "w3": pad_wT(params["w3"], f_pad, f_pad), "b3": pad_bcol(params["b3"], f_pad),
        "w4": pad_wT(params["w4"], c_pad, f_pad), "b4": pad_bcol(params["b4"], c_pad),
        "in_dim": in_dim, "out_dim": out_dim, "c_pad": c_pad, "f_pad": f_pad,
    }


def _vmem_capacity_bytes(default=64 * 1024 * 1024):
    """Physical VMEM per TensorCore: 128 MiB on v5e/v6e, 64 MiB on v7x.
    Falls back to the conservative v7x value if the query is unavailable."""
    try:
        info = pltpu.get_tpu_info()
        cap = getattr(info, "vmem_capacity_bytes", None)
        if cap:
            return int(cap)
    except Exception:
        pass
    return default


def _build_forward(prep, c_pad, tb, b_pad, vmem_limit_bytes, flops,
                   bytes_accessed, single_buffer_weights):
    weight_kwargs = ({"pipeline_mode": pl.Buffered(1)}
                     if single_buffer_weights else {})

    def resident(shape):
        # Constant block index -> stays VMEM-resident across all grid steps.
        return pl.BlockSpec(shape, lambda i: (0, 0), **weight_kwargs)

    stream_spec = pl.BlockSpec((c_pad, tb), lambda i: (0, i))

    return pl.pallas_call(
        dnn_kernel,
        out_shape=jax.ShapeDtypeStruct((c_pad, b_pad), jnp.bfloat16),
        grid=(b_pad // tb,),
        in_specs=[
            stream_spec,
            resident(prep["w1"].shape), resident(prep["b1"].shape),
            resident(prep["w2"].shape), resident(prep["b2"].shape),
            resident(prep["w3"].shape), resident(prep["b3"].shape),
            resident(prep["w4"].shape), resident(prep["b4"].shape),
        ],
        out_specs=stream_spec,
        compiler_params=pltpu.CompilerParams(
            dimension_semantics=("parallel",),
            vmem_limit_bytes=vmem_limit_bytes,
        ),
        cost_estimate=pl.CostEstimate(flops=flops, transcendentals=0,
                                      bytes_accessed=bytes_accessed),
    )


def dnn_forward(x, prep, *, batch_tile=512):
    """x: (B, numclass) f32 -> (B, numclass) f32."""
    B, in_dim = x.shape
    assert in_dim == prep["in_dim"]
    c_pad, f_pad = prep["c_pad"], prep["f_pad"]
    out_dim = prep["out_dim"]

    weight_keys = ("w1", "b1", "w2", "b2", "w3", "b3", "w4", "b4")
    weight_bytes = sum(int(prep[k].size) * prep[k].dtype.itemsize
                       for k in weight_keys)

    vmem_cap = _vmem_capacity_bytes()
    vmem_budget = (vmem_cap * 3) // 4          # ~96 MiB v5e/v6e, ~48 MiB v7x

    def footprint(tb, weight_bufs=2):
        # Double-buffered streamed xT/oT tiles (bf16), resident weights
        # (2x unless single-buffered -- budget conservatively for 2x), and
        # live in-kernel f32 h + its bf16 cast.
        stream = 2 * (c_pad * tb * 2) + 2 * (c_pad * tb * 2)
        inter = 3 * (f_pad * tb * 4)
        return weight_bufs * weight_bytes + stream + inter

    if 2 * weight_bytes > vmem_budget:
        # TODO(synk): add a hidden-dim (K/N)-tiled fallback (emit_pipeline over
        # f_pad chunks) for very large infeature; shrinking the batch tile
        # cannot reduce resident weight bytes.
        pass

    # Batch tile: lane-dense multiple of 128, as large as the VMEM budget allows.
    tb = max(LANE, min(_round_up(batch_tile, LANE), _round_up(B, LANE)))
    while tb > LANE and footprint(tb) > vmem_budget:
        tb = _round_up(tb // 2, LANE)

    b_pad = _round_up(max(B, tb), tb)
    # v7x megacore: prefer >= 2 grid steps so both TensorCores get work.
    if b_pad // tb == 1 and tb >= 2 * LANE and (tb // 2) % LANE == 0:
        tb //= 2
        b_pad = _round_up(max(B, tb), tb)

    # Streamed input built directly in bf16 (halves the HBM read and removes
    # the in-kernel cast); padded rows / batch columns are zero.
    xT = jnp.zeros((c_pad, b_pad), jnp.bfloat16)
    xT = xT.at[:in_dim, :B].set(x.T.astype(jnp.bfloat16))

    flops = 4 * b_pad * f_pad * (c_pad + f_pad)
    bytes_accessed = 2 * (c_pad * b_pad * 2) + weight_bytes
    vmem_limit = int(min((vmem_cap * 9) // 10, vmem_budget + (16 << 20)))

    args = (xT,
            prep["w1"], prep["b1"], prep["w2"], prep["b2"],
            prep["w3"], prep["b3"], prep["w4"], prep["b4"])
    try:
        # Preferred: single-buffered resident weights (saves weight_bytes VMEM).
        outT = _build_forward(prep, c_pad, tb, b_pad, vmem_limit, flops,
                              bytes_accessed, single_buffer_weights=True)(*args)
    except Exception:
        # Fallback if this JAX build rejects pipeline_mode on pallas_call specs.
        outT = _build_forward(prep, c_pad, tb, b_pad, vmem_limit, flops,
                              bytes_accessed, single_buffer_weights=False)(*args)

    return outT[:out_dim, :B].T.astype(jnp.float32)


def dnn_reference_f32(x, p):
    def lrelu(v):
        return jnp.where(v >= 0, v, 0.2 * v)
    h = lrelu(x @ p["w1"] + p["b1"])
    h = lrelu(h @ p["w2"] + p["b2"])
    h = lrelu(h @ p["w3"] + p["b3"])
    return h @ p["w4"] + p["b4"]


def dnn_reference_bf16(x, p):
    # Same numerics as the kernel: bf16 MXU operands, f32 accumulation.
    def lrelu(v):
        return jnp.where(v >= 0, v, 0.2 * v)

    def lin(h, w, b):
        return jnp.dot(h.astype(jnp.bfloat16), w.astype(jnp.bfloat16),
                       preferred_element_type=jnp.float32) + b

    h = lrelu(lin(x, p["w1"], p["b1"]))
    h = lrelu(lin(h, p["w2"], p["b2"]))
    h = lrelu(lin(h, p["w3"], p["b3"]))
    return lin(h, p["w4"], p["b4"])


if __name__ == "__main__":
    infeature = 32
    numclass = 8
    batch = 8

    key = jax.random.PRNGKey(0)
    kx, kp = jax.random.split(key)
    x = jax.random.normal(kx, (batch, numclass), dtype=jnp.float32)
    params = init_params(kp, infeature, numclass)
    prep = prepare_params(params)

    out = jax.block_until_ready(dnn_forward(x, prep))

    ref_bf16 = dnn_reference_bf16(x, params)   # kernel's MXU numerics
    ref_f32 = dnn_reference_f32(x, params)     # PyTorch (f32) semantics

    assert out.shape == (batch, numclass)
    assert out.dtype == jnp.float32
    assert jnp.allclose(out, ref_bf16, atol=2e-2, rtol=2e-2), \
        "mismatch vs bf16 reference"
    assert jnp.allclose(out, ref_f32, atol=5e-2, rtol=5e-2), \
        "mismatch vs f32 reference"

    print("KERNEL_OK")
</pallas_src>

<mosaic_0001>
module attributes {stable_mosaic.version = 11 : i64} {
  func.func @dnn_kernel(%arg0: i32, %arg1: memref<16x128xbf16, #tpu.memory_space<vmem>>, %arg2: memref<32x16xbf16, #tpu.memory_space<vmem>>, %arg3: memref<32x1xf32, #tpu.memory_space<vmem>>, %arg4: memref<32x32xbf16, #tpu.memory_space<vmem>>, %arg5: memref<32x1xf32, #tpu.memory_space<vmem>>, %arg6: memref<32x32xbf16, #tpu.memory_space<vmem>>, %arg7: memref<32x1xf32, #tpu.memory_space<vmem>>, %arg8: memref<16x32xbf16, #tpu.memory_space<vmem>>, %arg9: memref<16x1xf32, #tpu.memory_space<vmem>>, %arg10: memref<16x128xbf16, #tpu.memory_space<vmem>>) attributes {dimension_semantics = [#tpu.dimension_semantics<parallel>], iteration_bounds = array<i64: 1>, scalar_prefetch = 0 : i64, scratch_operands = 0 : i64, tpu.core_type = #tpu.core_type<tc>, window_params = [{transform_indices = @transform_0, window_bounds = array<i64: 16, 128>}, {pipeline_mode = #tpu.pipeline_mode<synchronous>, transform_indices = @transform_1, window_bounds = array<i64: 32, 16>}, {pipeline_mode = #tpu.pipeline_mode<synchronous>, transform_indices = @transform_2, window_bounds = array<i64: 32, 1>}, {pipeline_mode = #tpu.pipeline_mode<synchronous>, transform_indices = @transform_3, window_bounds = array<i64: 32, 32>}, {pipeline_mode = #tpu.pipeline_mode<synchronous>, transform_indices = @transform_4, window_bounds = array<i64: 32, 1>}, {pipeline_mode = #tpu.pipeline_mode<synchronous>, transform_indices = @transform_5, window_bounds = array<i64: 32, 32>}, {pipeline_mode = #tpu.pipeline_mode<synchronous>, transform_indices = @transform_6, window_bounds = array<i64: 32, 1>}, {pipeline_mode = #tpu.pipeline_mode<synchronous>, transform_indices = @transform_7, window_bounds = array<i64: 16, 32>}, {pipeline_mode = #tpu.pipeline_mode<synchronous>, transform_indices = @transform_8, window_bounds = array<i64: 16, 1>}, {transform_indices = @transform_9, window_bounds = array<i64: 16, 128>}]} {
    %c0 = arith.constant 0 : index
    %c0_0 = arith.constant 0 : index
    %0 = vector.load %arg1[%c0, %c0_0] : memref<16x128xbf16, #tpu.memory_space<vmem>>, vector<16x128xbf16>
    %c0_1 = arith.constant 0 : index
    %c0_2 = arith.constant 0 : index
    %1 = vector.load %arg2[%c0_1, %c0_2] : memref<32x16xbf16, #tpu.memory_space<vmem>>, vector<32x16xbf16>
    %cst = arith.constant dense<0.000000e+00> : vector<32x128xf32>
    %2 = tpu.matmul %1, %0, %cst {dimension_numbers = #tpu.dot_dimension_numbers<[1], [0], [0], [1], [0, 0, 1, 1], [], []>} : vector<32x16xbf16>, vector<16x128xbf16>, vector<32x128xf32> -> vector<32x128xf32>
    %c0_3 = arith.constant 0 : index
    %c0_4 = arith.constant 0 : index
    %3 = vector.load %arg3[%c0_3, %c0_4] : memref<32x1xf32, #tpu.memory_space<vmem>>, vector<32x1xf32>
    %4 = vector.broadcast %3 : vector<32x1xf32> to vector<32x128xf32>
    %5 = arith.addf %2, %4 : vector<32x128xf32>
    %cst_5 = arith.constant 0.000000e+00 : f32
    %6 = vector.broadcast %cst_5 : f32 to vector<32x128xf32>
    %7 = arith.cmpf oge, %5, %6 : vector<32x128xf32>
    %cst_6 = arith.constant 2.000000e-01 : f32
    %8 = vector.broadcast %cst_6 : f32 to vector<32x128xf32>
    %9 = arith.mulf %8, %5 : vector<32x128xf32>
    %10 = arith.select %7, %5, %9 : vector<32x128xi1>, vector<32x128xf32>
    %c0_7 = arith.constant 0 : index
    %c0_8 = arith.constant 0 : index
    %11 = vector.load %arg4[%c0_7, %c0_8] : memref<32x32xbf16, #tpu.memory_space<vmem>>, vector<32x32xbf16>
    %12 = arith.truncf %10 : vector<32x128xf32> to vector<32x128xbf16>
    %cst_9 = arith.constant dense<0.000000e+00> : vector<32x128xf32>
    %13 = tpu.matmul %11, %12, %cst_9 {dimension_numbers = #tpu.dot_dimension_numbers<[1], [0], [0], [1], [0, 0, 1, 1], [], []>} : vector<32x32xbf16>, vector<32x128xbf16>, vector<32x128xf32> -> vector<32x128xf32>
    %c0_10 = arith.constant 0 : index
    %c0_11 = arith.constant 0 : index
    %14 = vector.load %arg5[%c0_10, %c0_11] : memref<32x1xf32, #tpu.memory_space<vmem>>, vector<32x1xf32>
    %15 = vector.broadcast %14 : vector<32x1xf32> to vector<32x128xf32>
    %16 = arith.addf %13, %15 : vector<32x128xf32>
    %cst_12 = arith.constant 0.000000e+00 : f32
    %17 = vector.broadcast %cst_12 : f32 to vector<32x128xf32>
    %18 = arith.cmpf oge, %16, %17 : vector<32x128xf32>
    %cst_13 = arith.constant 2.000000e-01 : f32
    %19 = vector.broadcast %cst_13 : f32 to vector<32x128xf32>
    %20 = arith.mulf %19, %16 : vector<32x128xf32>
    %21 = arith.select %18, %16, %20 : vector<32x128xi1>, vector<32x128xf32>
    %c0_14 = arith.constant 0 : index
    %c0_15 = arith.constant 0 : index
    %22 = vector.load %arg6[%c0_14, %c0_15] : memref<32x32xbf16, #tpu.memory_space<vmem>>, vector<32x32xbf16>
    %23 = arith.truncf %21 : vector<32x128xf32> to vector<32x128xbf16>
    %cst_16 = arith.constant dense<0.000000e+00> : vector<32x128xf32>
    %24 = tpu.matmul %22, %23, %cst_16 {dimension_numbers = #tpu.dot_dimension_numbers<[1], [0], [0], [1], [0, 0, 1, 1], [], []>} : vector<32x32xbf16>, vector<32x128xbf16>, vector<32x128xf32> -> vector<32x128xf32>
    %c0_17 = arith.constant 0 : index
    %c0_18 = arith.constant 0 : index
    %25 = vector.load %arg7[%c0_17, %c0_18] : memref<32x1xf32, #tpu.memory_space<vmem>>, vector<32x1xf32>
    %26 = vector.broadcast %25 : vector<32x1xf32> to vector<32x128xf32>
    %27 = arith.addf %24, %26 : vector<32x128xf32>
    %cst_19 = arith.constant 0.000000e+00 : f32
    %28 = vector.broadcast %cst_19 : f32 to vector<32x128xf32>
    %29 = arith.cmpf oge, %27, %28 : vector<32x128xf32>
    %cst_20 = arith.constant 2.000000e-01 : f32
    %30 = vector.broadcast %cst_20 : f32 to vector<32x128xf32>
    %31 = arith.mulf %30, %27 : vector<32x128xf32>
    %32 = arith.select %29, %27, %31 : vector<32x128xi1>, vector<32x128xf32>
    %c0_21 = arith.constant 0 : index
    %c0_22 = arith.constant 0 : index
    %33 = vector.load %arg8[%c0_21, %c0_22] : memref<16x32xbf16, #tpu.memory_space<vmem>>, vector<16x32xbf16>
    %34 = arith.truncf %32 : vector<32x128xf32> to vector<32x128xbf16>
    %cst_23 = arith.constant dense<0.000000e+00> : vector<16x128xf32>
    %35 = tpu.matmul %33, %34, %cst_23 {dimension_numbers = #tpu.dot_dimension_numbers<[1], [0], [0], [1], [0, 0, 1, 1], [], []>} : vector<16x32xbf16>, vector<32x128xbf16>, vector<16x128xf32> -> vector<16x128xf32>
    %c0_24 = arith.constant 0 : index
    %c0_25 = arith.constant 0 : index
    %36 = vector.load %arg9[%c0_24, %c0_25] : memref<16x1xf32, #tpu.memory_space<vmem>>, vector<16x1xf32>
    %37 = vector.broadcast %36 : vector<16x1xf32> to vector<16x128xf32>
    %38 = arith.addf %35, %37 : vector<16x128xf32>
    %39 = arith.truncf %38 : vector<16x128xf32> to vector<16x128xbf16>
    %c0_26 = arith.constant 0 : index
    %c0_27 = arith.constant 0 : index
    %40 = vector.load %arg10[%c0_26, %c0_27] : memref<16x128xbf16, #tpu.memory_space<vmem>>, vector<16x128xbf16>
    tpu.vector_store %arg10[%c0_26, %c0_27], %39 {strides = array<i32>} : memref<16x128xbf16, #tpu.memory_space<vmem>>, vector<16x128xbf16>,
    return
  }
  func.func @transform_0(%arg0: i32) -> (i32, i32) {
    %c0_i32 = arith.constant 0 : i32
    %c0_i32_0 = arith.constant 0 : i32
    return %c0_i32, %arg0 : i32, i32
  }
  func.func @transform_1(%arg0: i32) -> (i32, i32) {
    %c0_i32 = arith.constant 0 : i32
    %c0_i32_0 = arith.constant 0 : i32
    %c0_i32_1 = arith.constant 0 : i32
    return %c0_i32, %c0_i32_0 : i32, i32
  }
  func.func @transform_2(%arg0: i32) -> (i32, i32) {
    %c0_i32 = arith.constant 0 : i32
    %c0_i32_0 = arith.constant 0 : i32
    %c0_i32_1 = arith.constant 0 : i32
    return %c0_i32, %c0_i32_0 : i32, i32
  }
  func.func @transform_3(%arg0: i32) -> (i32, i32) {
    %c0_i32 = arith.constant 0 : i32
    %c0_i32_0 = arith.constant 0 : i32
    %c0_i32_1 = arith.constant 0 : i32
    return %c0_i32, %c0_i32_0 : i32, i32
  }
  func.func @transform_4(%arg0: i32) -> (i32, i32) {
    %c0_i32 = arith.constant 0 : i32
    %c0_i32_0 = arith.constant 0 : i32
    %c0_i32_1 = arith.constant 0 : i32
    return %c0_i32, %c0_i32_0 : i32, i32
  }
  func.func @transform_5(%arg0: i32) -> (i32, i32) {
    %c0_i32 = arith.constant 0 : i32
    %c0_i32_0 = arith.constant 0 : i32
    %c0_i32_1 = arith.constant 0 : i32
    return %c0_i32, %c0_i32_0 : i32, i32
  }
  func.func @transform_6(%arg0: i32) -> (i32, i32) {
    %c0_i32 = arith.constant 0 : i32
    %c0_i32_0 = arith.constant 0 : i32
    %c0_i32_1 = arith.constant 0 : i32
    return %c0_i32, %c0_i32_0 : i32, i32
  }
  func.func @transform_7(%arg0: i32) -> (i32, i32) {
    %c0_i32 = arith.constant 0 : i32
    %c0_i32_0 = arith.constant 0 : i32
    %c0_i32_1 = arith.constant 0 : i32
    return %c0_i32, %c0_i32_0 : i32, i32
  }
  func.func @transform_8(%arg0: i32) -> (i32, i32) {
    %c0_i32 = arith.constant 0 : i32
    %c0_i32_0 = arith.constant 0 : i32
    %c0_i32_1 = arith.constant 0 : i32
    return %c0_i32, %c0_i32_0 : i32, i32
  }
  func.func @transform_9(%arg0: i32) -> (i32, i32) {
    %c0_i32 = arith.constant 0 : i32
    %c0_i32_0 = arith.constant 0 : i32
    return %c0_i32, %arg0 : i32, i32
  }
}

module attributes {stable_mosaic.version = 11 : i64} {
  func.func @dnn_kernel(%arg0: i32, %arg1: memref<16x128xbf16, #tpu.memory_space<vmem>>, %arg2: memref<32x16xbf16, #tpu.memory_space<vmem>>, %arg3: memref<32x1xf32, #tpu.memory_space<vmem>>, %arg4: memref<32x32xbf16, #tpu.memory_space<vmem>>, %arg5: memref<32x1xf32, #tpu.memory_space<vmem>>, %arg6: memref<32x32xbf16, #tpu.memory_space<vmem>>, %arg7: memref<32x1xf32, #tpu.memory_space<vmem>>, %arg8: memref<16x32xbf16, #tpu.memory_space<vmem>>, %arg9: memref<16x1xf32, #tpu.memory_space<vmem>>, %arg10: memref<16x128xbf16, #tpu.memory_space<vmem>>) attributes {dimension_semantics = [#tpu.dimension_semantics<parallel>], iteration_bounds = array<i64: 1>, scalar_prefetch = 0 : i64, scratch_operands = 0 : i64, tpu.core_type = #tpu.core_type<tc>, window_params = [{transform_indices = @transform_0, window_bounds = array<i64: 16, 128>}, {pipeline_mode = #tpu.pipeline_mode<synchronous>, transform_indices = @transform_1, window_bounds = array<i64: 32, 16>}, {pipeline_mode = #tpu.pipeline_mode<synchronous>, transform_indices = @transform_2, window_bounds = array<i64: 32, 1>}, {pipeline_mode = #tpu.pipeline_mode<synchronous>, transform_indices = @transform_3, window_bounds = array<i64: 32, 32>}, {pipeline_mode = #tpu.pipeline_mode<synchronous>, transform_indices = @transform_4, window_bounds = array<i64: 32, 1>}, {pipeline_mode = #tpu.pipeline_mode<synchronous>, transform_indices = @transform_5, window_bounds = array<i64: 32, 32>}, {pipeline_mode = #tpu.pipeline_mode<synchronous>, transform_indices = @transform_6, window_bounds = array<i64: 32, 1>}, {pipeline_mode = #tpu.pipeline_mode<synchronous>, transform_indices = @transform_7, window_bounds = array<i64: 16, 32>}, {pipeline_mode = #tpu.pipeline_mode<synchronous>, transform_indices = @transform_8, window_bounds = array<i64: 16, 1>}, {transform_indices = @transform_9, window_bounds = array<i64: 16, 128>}]} {
    %c0 = arith.constant 0 : index
    %c0_0 = arith.constant 0 : index
    %0 = vector.load %arg1[%c0, %c0_0] : memref<16x128xbf16, #tpu.memory_space<vmem>>, vector<16x128xbf16>
    %c0_1 = arith.constant 0 : index
    %c0_2 = arith.constant 0 : index
    %1 = vector.load %arg2[%c0_1, %c0_2] : memref<32x16xbf16, #tpu.memory_space<vmem>>, vector<32x16xbf16>
    %cst = arith.constant dense<0.000000e+00> : vector<32x128xf32>
    %2 = tpu.matmul %1, %0, %cst {dimension_numbers = #tpu.dot_dimension_numbers<[1], [0], [0], [1], [0, 0, 1, 1], [], []>} : vector<32x16xbf16>, vector<16x128xbf16>, vector<32x128xf32> -> vector<32x128xf32>
    %c0_3 = arith.constant 0 : index
    %c0_4 = arith.constant 0 : index
    %3 = vector.load %arg3[%c0_3, %c0_4] : memref<32x1xf32, #tpu.memory_space<vmem>>, vector<32x1xf32>
    %4 = vector.broadcast %3 : vector<32x1xf32> to vector<32x128xf32>
    %5 = arith.addf %2, %4 : vector<32x128xf32>
    %cst_5 = arith.constant 0.000000e+00 : f32
    %6 = vector.broadcast %cst_5 : f32 to vector<32x128xf32>
    %7 = arith.cmpf oge, %5, %6 : vector<32x128xf32>
    %cst_6 = arith.constant 2.000000e-01 : f32
    %8 = vector.broadcast %cst_6 : f32 to vector<32x128xf32>
    %9 = arith.mulf %8, %5 : vector<32x128xf32>
    %10 = arith.select %7, %5, %9 : vector<32x128xi1>, vector<32x128xf32>
    %c0_7 = arith.constant 0 : index
    %c0_8 = arith.constant 0 : index
    %11 = vector.load %arg4[%c0_7, %c0_8] : memref<32x32xbf16, #tpu.memory_space<vmem>>, vector<32x32xbf16>
    %12 = arith.truncf %10 : vector<32x128xf32> to vector<32x128xbf16>
    %cst_9 = arith.constant dense<0.000000e+00> : vector<32x128xf32>
    %13 = tpu.matmul %11, %12, %cst_9 {dimension_numbers = #tpu.dot_dimension_numbers<[1], [0], [0], [1], [0, 0, 1, 1], [], []>} : vector<32x32xbf16>, vector<32x128xbf16>, vector<32x128xf32> -> vector<32x128xf32>
    %c0_10 = arith.constant 0 : index
    %c0_11 = arith.constant 0 : index
    %14 = vector.load %arg5[%c0_10, %c0_11] : memref<32x1xf32, #tpu.memory_space<vmem>>, vector<32x1xf32>
    %15 = vector.broadcast %14 : vector<32x1xf32> to vector<32x128xf32>
    %16 = arith.addf %13, %15 : vector<32x128xf32>
    %cst_12 = arith.constant 0.000000e+00 : f32
    %17 = vector.broadcast %cst_12 : f32 to vector<32x128xf32>
    %18 = arith.cmpf oge, %16, %17 : vector<32x128xf32>
    %cst_13 = arith.constant 2.000000e-01 : f32
    %19 = vector.broadcast %cst_13 : f32 to vector<32x128xf32>
    %20 = arith.mulf %19, %16 : vector<32x128xf32>
    %21 = arith.select %18, %16, %20 : vector<32x128xi1>, vector<32x128xf32>
    %c0_14 = arith.constant 0 : index
    %c0_15 = arith.constant 0 : index
    %22 = vector.load %arg6[%c0_14, %c0_15] : memref<32x32xbf16, #tpu.memory_space<vmem>>, vector<32x32xbf16>
    %23 = arith.truncf %21 : vector<32x128xf32> to vector<32x128xbf16>
    %cst_16 = arith.constant dense<0.000000e+00> : vector<32x128xf32>
    %24 = tpu.matmul %22, %23, %cst_16 {dimension_numbers = #tpu.dot_dimension_numbers<[1], [0], [0], [1], [0, 0, 1, 1], [], []>} : vector<32x32xbf16>, vector<32x128xbf16>, vector<32x128xf32> -> vector<32x128xf32>
    %c0_17 = arith.constant 0 : index
    %c0_18 = arith.constant 0 : index
    %25 = vector.load %arg7[%c0_17, %c0_18] : memref<32x1xf32, #tpu.memory_space<vmem>>, vector<32x1xf32>
    %26 = vector.broadcast %25 : vector<32x1xf32> to vector<32x128xf32>
    %27 = arith.addf %24, %26 : vector<32x128xf32>
    %cst_19 = arith.constant 0.000000e+00 : f32
    %28 = vector.broadcast %cst_19 : f32 to vector<32x128xf32>
    %29 = arith.cmpf oge, %27, %28 : vector<32x128xf32>
    %cst_20 = arith.constant 2.000000e-01 : f32
    %30 = vector.broadcast %cst_20 : f32 to vector<32x128xf32>
    %31 = arith.mulf %30, %27 : vector<32x128xf32>
    %32 = arith.select %29, %27, %31 : vector<32x128xi1>, vector<32x128xf32>
    %c0_21 = arith.constant 0 : index
    %c0_22 = arith.constant 0 : index
    %33 = vector.load %arg8[%c0_21, %c0_22] : memref<16x32xbf16, #tpu.memory_space<vmem>>, vector<16x32xbf16>
    %34 = arith.truncf %32 : vector<32x128xf32> to vector<32x128xbf16>
    %cst_23 = arith.constant dense<0.000000e+00> : vector<16x128xf32>
    %35 = tpu.matmul %33, %34, %cst_23 {dimension_numbers = #tpu.dot_dimension_numbers<[1], [0], [0], [1], [0, 0, 1, 1], [], []>} : vector<16x32xbf16>, vector<32x128xbf16>, vector<16x128xf32> -> vector<16x128xf32>
    %c0_24 = arith.constant 0 : index
    %c0_25 = arith.constant 0 : index
    %36 = vector.load %arg9[%c0_24, %c0_25] : memref<16x1xf32, #tpu.memory_space<vmem>>, vector<16x1xf32>
    %37 = vector.broadcast %36 : vector<16x1xf32> to vector<16x128xf32>
    %38 = arith.addf %35, %37 : vector<16x128xf32>
    %39 = arith.truncf %38 : vector<16x128xf32> to vector<16x128xbf16>
    %c0_26 = arith.constant 0 : index
    %c0_27 = arith.constant 0 : index
    %40 = vector.load %arg10[%c0_26, %c0_27] : memref<16x128xbf16, #tpu.memory_space<vmem>>, vector<16x128xbf16>
    tpu.vector_store %arg10[%c0_26, %c0_27], %39 {strides = array<i32>} : memref<16x128xbf16, #tpu.memory_space<vmem>>, vector<16x128xbf16>,
    return
  }
  func.func @transform_0(%arg0: i32) -> (i32, i32) {
    %c0_i32 = arith.constant 0 : i32
    %c0_i32_0 = arith.constant 0 : i32
    return %c0_i32, %arg0 : i32, i32
  }
  func.func @transform_1(%arg0: i32) -> (i32, i32) {
    %c0_i32 = arith.constant 0 : i32
    %c0_i32_0 = arith.constant 0 : i32
    %c0_i32_1 = arith.constant 0 : i32
    return %c0_i32, %c0_i32_0 : i32, i32
  }
  func.func @transform_2(%arg0: i32) -> (i32, i32) {
    %c0_i32 = arith.constant 0 : i32
    %c0_i32_0 = arith.constant 0 : i32
    %c0_i32_1 = arith.constant 0 : i32
    return %c0_i32, %c0_i32_0 : i32, i32
  }
  func.func @transform_3(%arg0: i32) -> (i32, i32) {
    %c0_i32 = arith.constant 0 : i32
    %c0_i32_0 = arith.constant 0 : i32
    %c0_i32_1 = arith.constant 0 : i32
    return %c0_i32, %c0_i32_0 : i32, i32
  }
  func.func @transform_4(%arg0: i32) -> (i32, i32) {
    %c0_i32 = arith.constant 0 : i32
    %c0_i32_0 = arith.constant 0 : i32
    %c0_i32_1 = arith.constant 0 : i32
    return %c0_i32, %c0_i32_0 : i32, i32
  }
  func.func @transform_5(%arg0: i32) -> (i32, i32) {
    %c0_i32 = arith.constant 0 : i32
    %c0_i32_0 = arith.constant 0 : i32
    %c0_i32_1 = arith.constant 0 : i32
    return %c0_i32, %c0_i32_0 : i32, i32
  }
  func.func @transform_6(%arg0: i32) -> (i32, i32) {
    %c0_i32 = arith.constant 0 : i32
    %c0_i32_0 = arith.constant 0 : i32
    %c0_i32_1 = arith.constant 0 : i32
    return %c0_i32, %c0_i32_0 : i32, i32
  }
  func.func @transform_7(%arg0: i32) -> (i32, i32) {
    %c0_i32 = arith.constant 0 : i32
    %c0_i32_0 = arith.constant 0 : i32
    %c0_i32_1 = arith.constant 0 : i32
    return %c0_i32, %c0_i32_0 : i32, i32
  }
  func.func @transform_8(%arg0: i32) -> (i32, i32) {
    %c0_i32 = arith.constant 0 : i32
    %c0_i32_0 = arith.constant 0 : i32
    %c0_i32_1 = arith.constant 0 : i32
    return %c0_i32, %c0_i32_0 : i32, i32
  }
  func.func @transform_9(%arg0: i32) -> (i32, i32) {
    %c0_i32 = arith.constant 0 : i32
    %c0_i32_0 = arith.constant 0 : i32
    return %c0_i32, %arg0 : i32, i32
  }
}

</mosaic_0001>

<llo_original>
// kernel: tpu_custom_call.1
$region0: #{tpu_custom_call.1}
  #allocation0 [shape = 'u32[]', space=smem, size = 0x4, offset = 0x4, fixed_abs, tag = 'smem constant byte address 0x4 - core index']
  #allocation1 [shape = 'u32[72,128]{1,0:T(1,128)}', space=vmem, size = 0x9000, scoped, tag = 'internal scratch']
  %s0 = inlined_call_operand.vmem [shape: bf16[16,128], index: 0, kind: input, shape index: {}]
  %s1 = inlined_call_operand.vmem [shape: bf16[32,16], index: 1, kind: input, shape index: {}]
  %s2 = inlined_call_operand.vmem [shape: f32[32,1], index: 2, kind: input, shape index: {}]
  %s3 = inlined_call_operand.vmem [shape: bf16[32,32], index: 3, kind: input, shape index: {}]
  %s4 = inlined_call_operand.vmem [shape: f32[32,1], index: 4, kind: input, shape index: {}]
  %s5 = inlined_call_operand.vmem [shape: bf16[32,32], index: 5, kind: input, shape index: {}]
  %s6 = inlined_call_operand.vmem [shape: f32[32,1], index: 6, kind: input, shape index: {}]
  %s7 = inlined_call_operand.vmem [shape: bf16[16,32], index: 7, kind: input, shape index: {}]
  %s8 = inlined_call_operand.vmem [shape: f32[16,1], index: 8, kind: input, shape index: {}]
  %s9 = inlined_call_operand.hbm [shape: bf16[16,128], index: 9, kind: output, shape index: {}]
  %s10 = sld [smem:[#allocation0]]
  $region46: #{tpu_custom_call.1} parent=0
    _
  %s12 = ssub.s32 1, %s10
  %s13 = scalar_select 0, %s12, %s10
  $region1: #{tpu_custom_call.1} parent=0
    #allocation2 [shape = 'u8[4096]{0}', space=vmem, size = 0x1000, scoped, tag = 'output window, operand 0, single buffered']
    #allocation3 [shape = 's32[1]{0}', space=sflag, size = 0x4, scoped, tag = 'scoped memory for tpu_custom_call.1']
    %14 = vsyncpa [#allocation3], 0
    // Predicated region
    $region2: #{tpu_custom_call.1} parent=1 // pred_check
      _
    $region3: #{tpu_custom_call.1} parent=1 // pred_check_branch
      %16 = sbr.rel (0) target = $region5
    $region4: #{tpu_custom_call.1} parent=1 // pred_region
      _
    $region5: #{tpu_custom_call.1} parent=1 // pred_fallthru
      _
    // Predicated region
    $region6: #{tpu_custom_call.1} parent=1 // pred_check
      _
    $region7: #{tpu_custom_call.1} parent=1 // pred_check_branch
      %18 = sbr.rel (0) target = $region9
    $region8: #{tpu_custom_call.1} parent=1 // pred_region
      _
    $region9: #{tpu_custom_call.1} parent=1 // pred_fallthru
      _
    // Predicated region
    $region10: #{tpu_custom_call.1} parent=1 // pred_check
      _
    $region11: #{tpu_custom_call.1} parent=1 // pred_check_branch
      %20 = sbr.rel (0) target = $region13
    $region12: #{tpu_custom_call.1} parent=1 // pred_region
      _
    $region13: #{tpu_custom_call.1} parent=1 // pred_fallthru
      _
    // Predicated region
    $region14: #{tpu_custom_call.1} parent=1 // pred_check
      _
    $region15: #{tpu_custom_call.1} parent=1 // pred_check_branch
      %22 = sbr.rel (0) target = $region17
    $region16: #{tpu_custom_call.1} parent=1 // pred_region
      _
    $region17: #{tpu_custom_call.1} parent=1 // pred_fallthru
      _
    // Predicated region
    $region18: #{tpu_custom_call.1} parent=1 // pred_check
      _
    $region19: #{tpu_custom_call.1} parent=1 // pred_check_branch
      %24 = sbr.rel (0) target = $region21
    $region20: #{tpu_custom_call.1} parent=1 // pred_region
      _
    $region21: #{tpu_custom_call.1} parent=1 // pred_fallthru
      _
    // Predicated region
    $region22: #{tpu_custom_call.1} parent=1 // pred_check
      _
    $region23: #{tpu_custom_call.1} parent=1 // pred_check_branch
      %26 = sbr.rel (0) target = $region25
    $region24: #{tpu_custom_call.1} parent=1 // pred_region
      _
    $region25: #{tpu_custom_call.1} parent=1 // pred_fallthru
      _
    // Predicated region
    $region26: #{tpu_custom_call.1} parent=1 // pred_check
      _
    $region27: #{tpu_custom_call.1} parent=1 // pred_check_branch
      %28 = sbr.rel (0) target = $region29
    $region28: #{tpu_custom_call.1} parent=1 // pred_region
      _
    $region29: #{tpu_custom_call.1} parent=1 // pred_fallthru
      _
    // Predicated region
    $region30: #{tpu_custom_call.1} parent=1 // pred_check
      _
    $region31: #{tpu_custom_call.1} parent=1 // pred_check_branch
      %30 = sbr.rel (0) target = $region33
    $region32: #{tpu_custom_call.1} parent=1 // pred_region
      _
    $region33: #{tpu_custom_call.1} parent=1 // pred_fallthru
      _
    // Predicated region
    $region34: #{tpu_custom_call.1} parent=1 // pred_check
      _
    $region35: #{tpu_custom_call.1} parent=1 // pred_check_branch
      %32 = sbr.rel (0) target = $region37
    $region36: #{tpu_custom_call.1} parent=1 // pred_region
      _
    $region37: #{tpu_custom_call.1} parent=1 // pred_fallthru
      _
    %v34 = vld [vmem:[%s0] sm:$0xf]
    %v35 = vld [vmem:[%s0 + $0x4] sm:$0xf]
    %v36 = vld [vmem:[%s1] sm:$0xf]
    %v37 = vld [vmem:[%s1 + $0x4] sm:$0xf]
    %v38 = vld [vmem:[%s1 + $0x8] sm:$0xf]
    %v39 = vld [vmem:[%s1 + $0xc] sm:$0xf]
    %v40 = vld [vmem:[%s2] sm:$0xff]
    %v41 = vld [vmem:[%s2 + $0x8] sm:$0xff]
    %v42 = vld [vmem:[%s2 + $0x10] sm:$0xff]
    %v43 = vld [vmem:[%s2 + $0x18] sm:$0xff]
    %45 = vset.pattern.permute.xlu0 0
    %46 = vperm.xlu0 %45, %v40
    %v47 = vpop.permute.xlu0 %46
    %50 = vset.pattern.permute.xlu0 0
    %51 = vperm.xlu0 %50, %v41
    %v52 = vpop.permute.xlu0 %51
    %55 = vset.pattern.permute.xlu0 0
    %56 = vperm.xlu0 %55, %v42
    %v57 = vpop.permute.xlu0 %56
    %60 = vset.pattern.permute.xlu0 0
    %61 = vperm.xlu0 %60, %v43
    %v62 = vpop.permute.xlu0 %61
    %v68 = vunpack.c.l.b16 %v36
    %v69 = vunpack.c.l.b16 %v37
    %v70 = vunpack.c.l.b16 %v38
    %v71 = vunpack.c.l.b16 %v39
    %v72 = vpack.c.b16 %v69, %v68
    %v73 = vpack.c.b16 %v71, %v70
    %v76 = vunpack.c.l.b16 %v34
    %v77 = vunpack.c.l.b16 %v35
    %v78 = vpack.c.b16 %v77, %v76
    %vm80 = vcmask 130048
    %v82 = vsel %vm80, %v72, 0
    %v85 = vsel %vm80, %v73, 0
    %87 = vmatpush.bf16.msra.mxu0 0
    %88 = vmatpush.bf16.msra.mxu0 0
    %89 = vmatpush.bf16.msra.mxu0 0
    %90 = vmatpush.bf16.msra.mxu0 0
    %91 = vmatpush.bf16.msra.mxu0 0
    %92 = vmatpush.bf16.msra.mxu0 0
    %93 = vmatpush.bf16.msra.mxu0 0
    %94 = vmatpush.bf16.msra.mxu0 %v78
    %95 = vmatmul.bf16.gmra.mxu0 %v82
    %v96 = vpop.f32.mrf.mxu0
    %v97 = vadd.f32 %v47, %v96
    %v98 = vpop.f32.mrf.mxu0
    %v99 = vadd.f32 %v52, %v98
    %100 = vmatmul.bf16.gmra.mxu0 %v85
    %v101 = vpop.f32.mrf.mxu0
    %v102 = vadd.f32 %v57, %v101
    %v103 = vpop.f32.mrf.mxu0
    %v104 = vadd.f32 %v62, %v103
    %105 = vdwg.mxu0
    %vm106 = vcmp.ge.f32.partialorder %v97, 0.0
    %vm107 = vcmp.ge.f32.partialorder %v99, 0.0
    %vm108 = vcmp.ge.f32.partialorder %v102, 0.0
    %vm109 = vcmp.ge.f32.partialorder %v104, 0.0
    %v110 = vmul.f32 %v97, 0.2
    %v111 = vmul.f32 %v99, 0.2
    %v112 = vmul.f32 %v102, 0.2
    %v113 = vmul.f32 %v104, 0.2
    %v114 = vsel %vm106, %v97, %v110
    %v115 = vsel %vm107, %v99, %v111
    %v116 = vsel %vm108, %v102, %v112
    %v117 = vsel %vm109, %v104, %v113
    %v118 = vld [vmem:[%s3] sm:$0xf]
    %v119 = vld [vmem:[%s3 + $0x4] sm:$0xf]
    %v120 = vld [vmem:[%s3 + $0x8] sm:$0xf]
    %v121 = vld [vmem:[%s3 + $0xc] sm:$0xf]
    %v122 = vpack.c.bf16 %v115, %v114
    %v123 = vpack.c.bf16 %v117, %v116
    %v124 = vld [vmem:[%s4] sm:$0xff]
    %v125 = vld [vmem:[%s4 + $0x8] sm:$0xff]
    %v126 = vld [vmem:[%s4 + $0x10] sm:$0xff]
    %v127 = vld [vmem:[%s4 + $0x18] sm:$0xff]
    %129 = vset.pattern.permute.xlu0 0
    %130 = vperm.xlu0 %129, %v124
    %v131 = vpop.permute.xlu0 %130
    %134 = vset.pattern.permute.xlu0 0
    %135 = vperm.xlu0 %134, %v125
    %v136 = vpop.permute.xlu0 %135
    %139 = vset.pattern.permute.xlu0 0
    %140 = vperm.xlu0 %139, %v126
    %v141 = vpop.permute.xlu0 %140
    %144 = vset.pattern.permute.xlu0 0
    %145 = vperm.xlu0 %144, %v127
    %v146 = vpop.permute.xlu0 %145
    %v152 = vunpack.c.l.b16 %v118
    %v153 = vunpack.c.l.b16 %v119
    %v154 = vunpack.c.l.b16 %v120
    %v155 = vunpack.c.l.b16 %v121
    %v156 = vpack.c.b16 %v153, %v152
    %v157 = vpack.c.b16 %v155, %v154
    %vm158 = vcmask 261120
    %v160 = vsel %vm158, %v156, 0
    %v163 = vsel %vm158, %v157, 0
    %165 = vmatpush.bf16.msra.mxu0 0
    %166 = vmatpush.bf16.msra.mxu0 0
    %167 = vmatpush.bf16.msra.mxu0 0
    %168 = vmatpush.bf16.msra.mxu0 0
    %169 = vmatpush.bf16.msra.mxu0 0
    %170 = vmatpush.bf16.msra.mxu0 0
    %171 = vmatpush.bf16.msra.mxu0 %v123
    %172 = vmatpush.bf16.msra.mxu0 %v122
    %173 = vmatmul.bf16.gmra.mxu0 %v160
    %v174 = vpop.f32.mrf.mxu0
    %v175 = vadd.f32 %v131, %v174
    %v176 = vpop.f32.mrf.mxu0
    %v177 = vadd.f32 %v136, %v176
    %178 = vmatmul.bf16.gmra.mxu0 %v163
    %v179 = vpop.f32.mrf.mxu0
    %v180 = vadd.f32 %v141, %v179
    %v181 = vpop.f32.mrf.mxu0
    %v182 = vadd.f32 %v146, %v181
    %183 = vdwg.mxu0
    %vm184 = vcmp.ge.f32.partialorder %v175, 0.0
    %vm185 = vcmp.ge.f32.partialorder %v177, 0.0
    %vm186 = vcmp.ge.f32.partialorder %v180, 0.0
    %vm187 = vcmp.ge.f32.partialorder %v182, 0.0
    %v188 = vmul.f32 %v175, 0.2
    %v189 = vmul.f32 %v177, 0.2
    %v190 = vmul.f32 %v180, 0.2
    %v191 = vmul.f32 %v182, 0.2
    %v192 = vsel %vm184, %v175, %v188
    %v193 = vsel %vm185, %v177, %v189
    %v194 = vsel %vm186, %v180, %v190
    %v195 = vsel %vm187, %v182, %v191
    %v196 = vld [vmem:[%s5] sm:$0xf]
    %v197 = vld [vmem:[%s5 + $0x4] sm:$0xf]
    %v198 = vld [vmem:[%s5 + $0x8] sm:$0xf]
    %v199 = vld [vmem:[%s5 + $0xc] sm:$0xf]
    %v200 = vpack.c.bf16 %v193, %v192
    %v201 = vpack.c.bf16 %v195, %v194
    %v202 = vld [vmem:[%s6] sm:$0xff]
    %v203 = vld [vmem:[%s6 + $0x8] sm:$0xff]
    %v204 = vld [vmem:[%s6 + $0x10] sm:$0xff]
    %v205 = vld [vmem:[%s6 + $0x18] sm:$0xff]
    %207 = vset.pattern.permute.xlu0 0
    %208 = vperm.xlu0 %207, %v202
    %v209 = vpop.permute.xlu0 %208
    %212 = vset.pattern.permute.xlu0 0
    %213 = vperm.xlu0 %212, %v203
    %v214 = vpop.permute.xlu0 %213
    %217 = vset.pattern.permute.xlu0 0
    %218 = vperm.xlu0 %217, %v204
    %v219 = vpop.permute.xlu0 %218
    %222 = vset.pattern.permute.xlu0 0
    %223 = vperm.xlu0 %222, %v205
    %v224 = vpop.permute.xlu0 %223
    %v230 = vunpack.c.l.b16 %v196
    %v231 = vunpack.c.l.b16 %v197
    %v232 = vunpack.c.l.b16 %v198
    %v233 = vunpack.c.l.b16 %v199
    %v234 = vpack.c.b16 %v231, %v230
    %v235 = vpack.c.b16 %v233, %v232
    %v237 = vsel %vm158, %v234, 0
    %v240 = vsel %vm158, %v235, 0
    %242 = vmatpush.bf16.msra.mxu0 0
    %243 = vmatpush.bf16.msra.mxu0 0
    %244 = vmatpush.bf16.msra.mxu0 0
    %245 = vmatpush.bf16.msra.mxu0 0
    %246 = vmatpush.bf16.msra.mxu0 0
    %247 = vmatpush.bf16.msra.mxu0 0
    %248 = vmatpush.bf16.msra.mxu0 %v201
    %249 = vmatpush.bf16.msra.mxu0 %v200
    %250 = vmatmul.bf16.gmra.mxu0 %v237
    %v251 = vpop.f32.mrf.mxu0
    %v252 = vadd.f32 %v209, %v251
    %v253 = vpop.f32.mrf.mxu0
    %v254 = vadd.f32 %v214, %v253
    %255 = vmatmul.bf16.gmra.mxu0 %v240
    %v256 = vpop.f32.mrf.mxu0
    %v257 = vadd.f32 %v219, %v256
    %v258 = vpop.f32.mrf.mxu0
    %v259 = vadd.f32 %v224, %v258
    %260 = vdwg.mxu0
    %vm261 = vcmp.ge.f32.partialorder %v252, 0.0
    %vm262 = vcmp.ge.f32.partialorder %v254, 0.0
    %vm263 = vcmp.ge.f32.partialorder %v257, 0.0
    %vm264 = vcmp.ge.f32.partialorder %v259, 0.0
    %v265 = vmul.f32 %v252, 0.2
    %v266 = vmul.f32 %v254, 0.2
    %v267 = vmul.f32 %v257, 0.2
    %v268 = vmul.f32 %v259, 0.2
    %v269 = vsel %vm261, %v252, %v265
    %v270 = vsel %vm262, %v254, %v266
    %v271 = vsel %vm263, %v257, %v267
    %v272 = vsel %vm264, %v259, %v268
    %v273 = vld [vmem:[%s7] sm:$0xf]
    %v274 = vld [vmem:[%s7 + $0x4] sm:$0xf]
    %v275 = vpack.c.bf16 %v270, %v269
    %v276 = vpack.c.bf16 %v272, %v271
    %v277 = vld [vmem:[%s8] sm:$0xff]
    %v278 = vld [vmem:[%s8 + $0x8] sm:$0xff]
    %280 = vset.pattern.permute.xlu0 0
    %281 = vperm.xlu0 %280, %v277
    %v282 = vpop.permute.xlu0 %281
    %285 = vset.pattern.permute.xlu0 0
    %286 = vperm.xlu0 %285, %v278
    %v287 = vpop.permute.xlu0 %286
    %v291 = vunpack.c.l.b16 %v273
    %v292 = vunpack.c.l.b16 %v274
    %v293 = vpack.c.b16 %v292, %v291
    %v295 = vsel %vm158, %v293, 0
    %297 = vmatpush.bf16.msra.mxu0 0
    %298 = vmatpush.bf16.msra.mxu0 0
    %299 = vmatpush.bf16.msra.mxu0 0
    %300 = vmatpush.bf16.msra.mxu0 0
    %301 = vmatpush.bf16.msra.mxu0 0
    %302 = vmatpush.bf16.msra.mxu0 0
    %303 = vmatpush.bf16.msra.mxu0 %v276
    %304 = vmatpush.bf16.msra.mxu0 %v275
    %305 = vmatmul.bf16.gmra.mxu0 %v295
    %v306 = vpop.f32.mrf.mxu0
    %v307 = vadd.f32 %v282, %v306
    %v308 = vpop.f32.mrf.mxu0
    %v309 = vadd.f32 %v287, %v308
    %310 = vdwg.mxu0
    %v311 = vpack.c.bf16 %v307, %v307
    %v312 = vpack.c.bf16 %v309, %v309
    %313 = vst [vmem:[#allocation2] sm:$0xf] %v311
    %314 = vst [vmem:[#allocation2 + $0x4] sm:$0xf] %v312
    // Predicated region
    $region38: #{tpu_custom_call.1} parent=1 // pred_check
      _
    $region39: #{tpu_custom_call.1} parent=1 // pred_check_branch
      %316 = sbr.rel (0) target = $region41
    $region40: #{tpu_custom_call.1} parent=1 // pred_region
      %318 = vsyncadd [#allocation3], 0
      %s319 = sshll.u32 [#allocation2], 4
      %s320 = int_to_ptr.vmem [resolvable:$true] %s319
      %s321 = sshll.u32 %s9, 4
      %s322 = int_to_ptr.hbm [resolvable:$true] %s321
      %327 = dma.vmem_to_hbm [thread:$0]  %s320, 128, %s322, [#allocation3], 64, 64, 4
    $region41: #{tpu_custom_call.1} parent=1 // pred_fallthru
      _
    // Predicated region
    $region42: #{tpu_custom_call.1} parent=1 // pred_check
      _
    $region43: #{tpu_custom_call.1} parent=1 // pred_check_branch
      %329 = sbr.rel (0) target = $region45
    $region44: #{tpu_custom_call.1} parent=1 // pred_region
      %331 = dma.done [#allocation3], 128
    $region45: #{tpu_custom_call.1} parent=1 // pred_fallthru
      _
    %332 = vsyncpa [#allocation3], 1

// kernel: tpu_custom_call.1
$region0: #{tpu_custom_call.1}
  #allocation0 [shape = 'u32[]', space=smem, size = 0x4, offset = 0x4, fixed_abs, tag = 'smem constant byte address 0x4 - core index']
  #allocation1 [shape = 'u32[72,128]{1,0:T(1,128)}', space=vmem, size = 0x9000, scoped, tag = 'internal scratch']
  %s0 = inlined_call_operand.vmem [shape: bf16[16,128], index: 0, kind: input, shape index: {}]
  %s1 = inlined_call_operand.vmem [shape: bf16[32,16], index: 1, kind: input, shape index: {}]
  %s2 = inlined_call_operand.vmem [shape: f32[32,1], index: 2, kind: input, shape index: {}]
  %s3 = inlined_call_operand.vmem [shape: bf16[32,32], index: 3, kind: input, shape index: {}]
  %s4 = inlined_call_operand.vmem [shape: f32[32,1], index: 4, kind: input, shape index: {}]
  %s5 = inlined_call_operand.vmem [shape: bf16[32,32], index: 5, kind: input, shape index: {}]
  %s6 = inlined_call_operand.vmem [shape: f32[32,1], index: 6, kind: input, shape index: {}]
  %s7 = inlined_call_operand.vmem [shape: bf16[16,32], index: 7, kind: input, shape index: {}]
  %s8 = inlined_call_operand.vmem [shape: f32[16,1], index: 8, kind: input, shape index: {}]
  %s9 = inlined_call_operand.hbm [shape: bf16[16,128], index: 9, kind: output, shape index: {}]
  %s10 = sld [smem:[#allocation0]]
  $region46: #{tpu_custom_call.1} parent=0
    _
  %s12 = ssub.s32 1, %s10
  %s13 = scalar_select 0, %s12, %s10
  $region1: #{tpu_custom_call.1} parent=0
    #allocation2 [shape = 'u8[4096]{0}', space=vmem, size = 0x1000, scoped, tag = 'output window, operand 0, single buffered']
    #allocation3 [shape = 's32[1]{0}', space=sflag, size = 0x4, scoped, tag = 'scoped memory for tpu_custom_call.1']
    %14 = vsyncpa [#allocation3], 0
    // Predicated region
    $region2: #{tpu_custom_call.1} parent=1 // pred_check
      _
    $region3: #{tpu_custom_call.1} parent=1 // pred_check_branch
      %16 = sbr.rel (0) target = $region5
    $region4: #{tpu_custom_call.1} parent=1 // pred_region
      _
    $region5: #{tpu_custom_call.1} parent=1 // pred_fallthru
      _
    // Predicated region
    $region6: #{tpu_custom_call.1} parent=1 // pred_check
      _
    $region7: #{tpu_custom_call.1} parent=1 // pred_check_branch
      %18 = sbr.rel (0) target = $region9
    $region8: #{tpu_custom_call.1} parent=1 // pred_region
      _
    $region9: #{tpu_custom_call.1} parent=1 // pred_fallthru
      _
    // Predicated region
    $region10: #{tpu_custom_call.1} parent=1 // pred_check
      _
    $region11: #{tpu_custom_call.1} parent=1 // pred_check_branch
      %20 = sbr.rel (0) target = $region13
    $region12: #{tpu_custom_call.1} parent=1 // pred_region
      _
    $region13: #{tpu_custom_call.1} parent=1 // pred_fallthru
      _
    // Predicated region
    $region14: #{tpu_custom_call.1} parent=1 // pred_check
      _
    $region15: #{tpu_custom_call.1} parent=1 // pred_check_branch
      %22 = sbr.rel (0) target = $region17
    $region16: #{tpu_custom_call.1} parent=1 // pred_region
      _
    $region17: #{tpu_custom_call.1} parent=1 // pred_fallthru
      _
    // Predicated region
    $region18: #{tpu_custom_call.1} parent=1 // pred_check
      _
    $region19: #{tpu_custom_call.1} parent=1 // pred_check_branch
      %24 = sbr.rel (0) target = $region21
    $region20: #{tpu_custom_call.1} parent=1 // pred_region
      _
    $region21: #{tpu_custom_call.1} parent=1 // pred_fallthru
      _
    // Predicated region
    $region22: #{tpu_custom_call.1} parent=1 // pred_check
      _
    $region23: #{tpu_custom_call.1} parent=1 // pred_check_branch
      %26 = sbr.rel (0) target = $region25
    $region24: #{tpu_custom_call.1} parent=1 // pred_region
      _
    $region25: #{tpu_custom_call.1} parent=1 // pred_fallthru
      _
    // Predicated region
    $region26: #{tpu_custom_call.1} parent=1 // pred_check
      _
    $region27: #{tpu_custom_call.1} parent=1 // pred_check_branch
      %28 = sbr.rel (0) target = $region29
    $region28: #{tpu_custom_call.1} parent=1 // pred_region
      _
    $region29: #{tpu_custom_call.1} parent=1 // pred_fallthru
      _
    // Predicated region
    $region30: #{tpu_custom_call.1} parent=1 // pred_check
      _
    $region31: #{tpu_custom_call.1} parent=1 // pred_check_branch
      %30 = sbr.rel (0) target = $region33
    $region32: #{tpu_custom_call.1} parent=1 // pred_region
      _
    $region33: #{tpu_custom_call.1} parent=1 // pred_fallthru
      _
    // Predicated region
    $region34: #{tpu_custom_call.1} parent=1 // pred_check
      _
    $region35: #{tpu_custom_call.1} parent=1 // pred_check_branch
      %32 = sbr.rel (0) target = $region37
    $region36: #{tpu_custom_call.1} parent=1 // pred_region
      _
    $region37: #{tpu_custom_call.1} parent=1 // pred_fallthru
      _
    %v34 = vld [vmem:[%s0] sm:$0xf]
    %v35 = vld [vmem:[%s0 + $0x4] sm:$0xf]
    %v36 = vld [vmem:[%s1] sm:$0xf]
    %v37 = vld [vmem:[%s1 + $0x4] sm:$0xf]
    %v38 = vld [vmem:[%s1 + $0x8] sm:$0xf]
    %v39 = vld [vmem:[%s1 + $0xc] sm:$0xf]
    %v40 = vld [vmem:[%s2] sm:$0xff]
    %v41 = vld [vmem:[%s2 + $0x8] sm:$0xff]
    %v42 = vld [vmem:[%s2 + $0x10] sm:$0xff]
    %v43 = vld [vmem:[%s2 + $0x18] sm:$0xff]
    %45 = vset.pattern.permute.xlu0 0
    %46 = vperm.xlu0 %45, %v40
    %v47 = vpop.permute.xlu0 %46
    %50 = vset.pattern.permute.xlu0 0
    %51 = vperm.xlu0 %50, %v41
    %v52 = vpop.permute.xlu0 %51
    %55 = vset.pattern.permute.xlu0 0
    %56 = vperm.xlu0 %55, %v42
    %v57 = vpop.permute.xlu0 %56
    %60 = vset.pattern.permute.xlu0 0
    %61 = vperm.xlu0 %60, %v43
    %v62 = vpop.permute.xlu0 %61
    %v68 = vunpack.c.l.b16 %v36
    %v69 = vunpack.c.l.b16 %v37
    %v70 = vunpack.c.l.b16 %v38
    %v71 = vunpack.c.l.b16 %v39
    %v72 = vpack.c.b16 %v69, %v68
    %v73 = vpack.c.b16 %v71, %v70
    %v76 = vunpack.c.l.b16 %v34
    %v77 = vunpack.c.l.b16 %v35
    %v78 = vpack.c.b16 %v77, %v76
    %vm80 = vcmask 130048
    %v82 = vsel %vm80, %v72, 0
    %v85 = vsel %vm80, %v73, 0
    %87 = vmatpush.bf16.msra.mxu0 0
    %88 = vmatpush.bf16.msra.mxu0 0
    %89 = vmatpush.bf16.msra.mxu0 0
    %90 = vmatpush.bf16.msra.mxu0 0
    %91 = vmatpush.bf16.msra.mxu0 0
    %92 = vmatpush.bf16.msra.mxu0 0
    %93 = vmatpush.bf16.msra.mxu0 0
    %94 = vmatpush.bf16.msra.mxu0 %v78
    %95 = vmatmul.bf16.gmra.mxu0 %v82
    %v96 = vpop.f32.mrf.mxu0
    %v97 = vadd.f32 %v47, %v96
    %v98 = vpop.f32.mrf.mxu0
    %v99 = vadd.f32 %v52, %v98
    %100 = vmatmul.bf16.gmra.mxu0 %v85
    %v101 = vpop.f32.mrf.mxu0
    %v102 = vadd.f32 %v57, %v101
    %v103 = vpop.f32.mrf.mxu0
    %v104 = vadd.f32 %v62, %v103
    %105 = vdwg.mxu0
    %vm106 = vcmp.ge.f32.partialorder %v97, 0.0
    %vm107 = vcmp.ge.f32.partialorder %v99, 0.0
    %vm108 = vcmp.ge.f32.partialorder %v102, 0.0
    %vm109 = vcmp.ge.f32.partialorder %v104, 0.0
    %v110 = vmul.f32 %v97, 0.2
    %v111 = vmul.f32 %v99, 0.2
    %v112 = vmul.f32 %v102, 0.2
    %v113 = vmul.f32 %v104, 0.2
    %v114 = vsel %vm106, %v97, %v110
    %v115 = vsel %vm107, %v99, %v111
    %v116 = vsel %vm108, %v102, %v112
    %v117 = vsel %vm109, %v104, %v113
    %v118 = vld [vmem:[%s3] sm:$0xf]
    %v119 = vld [vmem:[%s3 + $0x4] sm:$0xf]
    %v120 = vld [vmem:[%s3 + $0x8] sm:$0xf]
    %v121 = vld [vmem:[%s3 + $0xc] sm:$0xf]
    %v122 = vpack.c.bf16 %v115, %v114
    %v123 = vpack.c.bf16 %v117, %v116
    %v124 = vld [vmem:[%s4] sm:$0xff]
    %v125 = vld [vmem:[%s4 + $0x8] sm:$0xff]
    %v126 = vld [vmem:[%s4 + $0x10] sm:$0xff]
    %v127 = vld [vmem:[%s4 + $0x18] sm:$0xff]
    %129 = vset.pattern.permute.xlu0 0
    %130 = vperm.xlu0 %129, %v124
    %v131 = vpop.permute.xlu0 %130
    %134 = vset.pattern.permute.xlu0 0
    %135 = vperm.xlu0 %134, %v125
    %v136 = vpop.permute.xlu0 %135
    %139 = vset.pattern.permute.xlu0 0
    %140 = vperm.xlu0 %139, %v126
    %v141 = vpop.permute.xlu0 %140
    %144 = vset.pattern.permute.xlu0 0
    %145 = vperm.xlu0 %144, %v127
    %v146 = vpop.permute.xlu0 %145
    %v152 = vunpack.c.l.b16 %v118
    %v153 = vunpack.c.l.b16 %v119
    %v154 = vunpack.c.l.b16 %v120
    %v155 = vunpack.c.l.b16 %v121
    %v156 = vpack.c.b16 %v153, %v152
    %v157 = vpack.c.b16 %v155, %v154
    %vm158 = vcmask 261120
    %v160 = vsel %vm158, %v156, 0
    %v163 = vsel %vm158, %v157, 0
    %165 = vmatpush.bf16.msra.mxu0 0
    %166 = vmatpush.bf16.msra.mxu0 0
    %167 = vmatpush.bf16.msra.mxu0 0
    %168 = vmatpush.bf16.msra.mxu0 0
    %169 = vmatpush.bf16.msra.mxu0 0
    %170 = vmatpush.bf16.msra.mxu0 0
    %171 = vmatpush.bf16.msra.mxu0 %v123
    %172 = vmatpush.bf16.msra.mxu0 %v122
    %173 = vmatmul.bf16.gmra.mxu0 %v160
    %v174 = vpop.f32.mrf.mxu0
    %v175 = vadd.f32 %v131, %v174
    %v176 = vpop.f32.mrf.mxu0
    %v177 = vadd.f32 %v136, %v176
    %178 = vmatmul.bf16.gmra.mxu0 %v163
    %v179 = vpop.f32.mrf.mxu0
    %v180 = vadd.f32 %v141, %v179
    %v181 = vpop.f32.mrf.mxu0
    %v182 = vadd.f32 %v146, %v181
    %183 = vdwg.mxu0
    %vm184 = vcmp.ge.f32.partialorder %v175, 0.0
    %vm185 = vcmp.ge.f32.partialorder %v177, 0.0
    %vm186 = vcmp.ge.f32.partialorder %v180, 0.0
    %vm187 = vcmp.ge.f32.partialorder %v182, 0.0
    %v188 = vmul.f32 %v175, 0.2
    %v189 = vmul.f32 %v177, 0.2
    %v190 = vmul.f32 %v180, 0.2
    %v191 = vmul.f32 %v182, 0.2
    %v192 = vsel %vm184, %v175, %v188
    %v193 = vsel %vm185, %v177, %v189
    %v194 = vsel %vm186, %v180, %v190
    %v195 = vsel %vm187, %v182, %v191
    %v196 = vld [vmem:[%s5] sm:$0xf]
    %v197 = vld [vmem:[%s5 + $0x4] sm:$0xf]
    %v198 = vld [vmem:[%s5 + $0x8] sm:$0xf]
    %v199 = vld [vmem:[%s5 + $0xc] sm:$0xf]
    %v200 = vpack.c.bf16 %v193, %v192
    %v201 = vpack.c.bf16 %v195, %v194
    %v202 = vld [vmem:[%s6] sm:$0xff]
    %v203 = vld [vmem:[%s6 + $0x8] sm:$0xff]
    %v204 = vld [vmem:[%s6 + $0x10] sm:$0xff]
    %v205 = vld [vmem:[%s6 + $0x18] sm:$0xff]
    %207 = vset.pattern.permute.xlu0 0
    %208 = vperm.xlu0 %207, %v202
    %v209 = vpop.permute.xlu0 %208
    %212 = vset.pattern.permute.xlu0 0
    %213 = vperm.xlu0 %212, %v203
    %v214 = vpop.permute.xlu0 %213
    %217 = vset.pattern.permute.xlu0 0
    %218 = vperm.xlu0 %217, %v204
    %v219 = vpop.permute.xlu0 %218
    %222 = vset.pattern.permute.xlu0 0
    %223 = vperm.xlu0 %222, %v205
    %v224 = vpop.permute.xlu0 %223
    %v230 = vunpack.c.l.b16 %v196
    %v231 = vunpack.c.l.b16 %v197
    %v232 = vunpack.c.l.b16 %v198
    %v233 = vunpack.c.l.b16 %v199
    %v234 = vpack.c.b16 %v231, %v230
    %v235 = vpack.c.b16 %v233, %v232
    %v237 = vsel %vm158, %v234, 0
    %v240 = vsel %vm158, %v235, 0
    %242 = vmatpush.bf16.msra.mxu0 0
    %243 = vmatpush.bf16.msra.mxu0 0
    %244 = vmatpush.bf16.msra.mxu0 0
    %245 = vmatpush.bf16.msra.mxu0 0
    %246 = vmatpush.bf16.msra.mxu0 0
    %247 = vmatpush.bf16.msra.mxu0 0
    %248 = vmatpush.bf16.msra.mxu0 %v201
    %249 = vmatpush.bf16.msra.mxu0 %v200
    %250 = vmatmul.bf16.gmra.mxu0 %v237
    %v251 = vpop.f32.mrf.mxu0
    %v252 = vadd.f32 %v209, %v251
    %v253 = vpop.f32.mrf.mxu0
    %v254 = vadd.f32 %v214, %v253
    %255 = vmatmul.bf16.gmra.mxu0 %v240
    %v256 = vpop.f32.mrf.mxu0
    %v257 = vadd.f32 %v219, %v256
    %v258 = vpop.f32.mrf.mxu0
    %v259 = vadd.f32 %v224, %v258
    %260 = vdwg.mxu0
    %vm261 = vcmp.ge.f32.partialorder %v252, 0.0
    %vm262 = vcmp.ge.f32.partialorder %v254, 0.0
    %vm263 = vcmp.ge.f32.partialorder %v257, 0.0
    %vm264 = vcmp.ge.f32.partialorder %v259, 0.0
    %v265 = vmul.f32 %v252, 0.2
    %v266 = vmul.f32 %v254, 0.2
    %v267 = vmul.f32 %v257, 0.2
    %v268 = vmul.f32 %v259, 0.2
    %v269 = vsel %vm261, %v252, %v265
    %v270 = vsel %vm262, %v254, %v266
    %v271 = vsel %vm263, %v257, %v267
    %v272 = vsel %vm264, %v259, %v268
    %v273 = vld [vmem:[%s7] sm:$0xf]
    %v274 = vld [vmem:[%s7 + $0x4] sm:$0xf]
    %v275 = vpack.c.bf16 %v270, %v269
    %v276 = vpack.c.bf16 %v272, %v271
    %v277 = vld [vmem:[%s8] sm:$0xff]
    %v278 = vld [vmem:[%s8 + $0x8] sm:$0xff]
    %280 = vset.pattern.permute.xlu0 0
    %281 = vperm.xlu0 %280, %v277
    %v282 = vpop.permute.xlu0 %281
    %285 = vset.pattern.permute.xlu0 0
    %286 = vperm.xlu0 %285, %v278
    %v287 = vpop.permute.xlu0 %286
    %v291 = vunpack.c.l.b16 %v273
    %v292 = vunpack.c.l.b16 %v274
    %v293 = vpack.c.b16 %v292, %v291
    %v295 = vsel %vm158, %v293, 0
    %297 = vmatpush.bf16.msra.mxu0 0
    %298 = vmatpush.bf16.msra.mxu0 0
    %299 = vmatpush.bf16.msra.mxu0 0
    %300 = vmatpush.bf16.msra.mxu0 0
    %301 = vmatpush.bf16.msra.mxu0 0
    %302 = vmatpush.bf16.msra.mxu0 0
    %303 = vmatpush.bf16.msra.mxu0 %v276
    %304 = vmatpush.bf16.msra.mxu0 %v275
    %305 = vmatmul.bf16.gmra.mxu0 %v295
    %v306 = vpop.f32.mrf.mxu0
    %v307 = vadd.f32 %v282, %v306
    %v308 = vpop.f32.mrf.mxu0
    %v309 = vadd.f32 %v287, %v308
    %310 = vdwg.mxu0
    %v311 = vpack.c.bf16 %v307, %v307
    %v312 = vpack.c.bf16 %v309, %v309
    %313 = vst [vmem:[#allocation2] sm:$0xf] %v311
    %314 = vst [vmem:[#allocation2 + $0x4] sm:$0xf] %v312
    // Predicated region
    $region38: #{tpu_custom_call.1} parent=1 // pred_check
      _
    $region39: #{tpu_custom_call.1} parent=1 // pred_check_branch
      %316 = sbr.rel (0) target = $region41
    $region40: #{tpu_custom_call.1} parent=1 // pred_region
      %318 = vsyncadd [#allocation3], 0
      %s319 = sshll.u32 [#allocation2], 4
      %s320 = int_to_ptr.vmem [resolvable:$true] %s319
      %s321 = sshll.u32 %s9, 4
      %s322 = int_to_ptr.hbm [resolvable:$true] %s321
      %327 = dma.vmem_to_hbm [thread:$0]  %s320, 128, %s322, [#allocation3], 64, 64, 4
    $region41: #{tpu_custom_call.1} parent=1 // pred_fallthru
      _
    // Predicated region
    $region42: #{tpu_custom_call.1} parent=1 // pred_check
      _
    $region43: #{tpu_custom_call.1} parent=1 // pred_check_branch
      %329 = sbr.rel (0) target = $region45
    $region44: #{tpu_custom_call.1} parent=1 // pred_region
      %331 = dma.done [#allocation3], 128
    $region45: #{tpu_custom_call.1} parent=1 // pred_fallthru
      _
    %332 = vsyncpa [#allocation3], 1

</llo_original>
